<compile_context>
chip_gen: v5e
topology: v5e:2x2
jax: 0.10.0
libtpu: 0.0.40
codegen_flags: <defaults>
</compile_context>

<pallas_src>
import functools

import jax
import jax.numpy as jnp
from jax.experimental import pallas as pl
from jax.experimental.pallas import tpu as pltpu

EPS = 1e-3
_MAX_BLOCK_BYTES = 8 * 1024 * 1024        # per-tile cap (review: 4-8 MiB)
_VMEM_LIMIT_BYTES = 48 * 1024 * 1024      # explicit scoped-VMEM limit
_FUSED_MAX_F32_BYTES = 4 * 1024 * 1024    # single-pass path threshold (f32 bytes)


# --------------------------------------------------------------------------- #
# Fused single-pass kernel (small activations: whole (N, C, L) resident in VMEM)
# --------------------------------------------------------------------------- #
def _bn_fused_kernel(x_ref, gamma_ref, beta_ref, o_ref, *, eps):
    x = x_ref[...].astype(jnp.float32)                             # (N, C, L)
    count = jnp.float32(x.shape[0] * x.shape[2])
    # Lane reduce first (XLU), then elementwise adds across the batch dim.
    s = jnp.sum(jnp.sum(x, axis=2, keepdims=True), axis=0)         # (C, 1)
    ss = jnp.sum(jnp.sum(x * x, axis=2, keepdims=True), axis=0)    # (C, 1)
    mean = s / count
    var = jnp.maximum(ss / count - mean * mean, 0.0)               # biased var
    scale = gamma_ref[...] * jax.lax.rsqrt(var + eps)              # (C, 1)
    bias = beta_ref[...] - mean * scale                            # (C, 1)
    o_ref[...] = (x * scale + bias).astype(o_ref.dtype)


# --------------------------------------------------------------------------- #
# Two-pass streaming kernels (large activations)
# --------------------------------------------------------------------------- #
def _bn_stats_kernel(x_ref, sum_ref, sumsq_ref, *, l_total):
    """Accumulate per-(n, channel) sum(x) / sum(x*x) across the L grid axis."""
    l_idx = pl.program_id(1)

    @pl.when(l_idx == 0)
    def _():
        sum_ref[...] = jnp.zeros_like(sum_ref)
        sumsq_ref[...] = jnp.zeros_like(sumsq_ref)

    x = x_ref[...].astype(jnp.float32)                             # (C, l_tile)
    # Mask the padded tail lanes of a partial last block (cdiv grid).
    lane = jax.lax.broadcasted_iota(jnp.int32, x.shape, 1)
    valid = (l_idx * x.shape[1] + lane) < l_total
    x = jnp.where(valid, x, 0.0)

    sum_ref[...] += jnp.sum(x, axis=-1, keepdims=True)             # (C, 1)
    sumsq_ref[...] += jnp.sum(x * x, axis=-1, keepdims=True)       # (C, 1)


def _bn_norm_kernel(x_ref, scale_ref, bias_ref, o_ref):
    """y = x * scale + bias with per-channel (C, 1) scale/bias."""
    x = x_ref[...].astype(jnp.float32)                             # (C, l_tile)
    o_ref[...] = (x * scale_ref[...] + bias_ref[...]).astype(o_ref.dtype)


def _pick_l_tile(length, channels, itemsize, max_block_bytes=_MAX_BLOCK_BYTES):
    """Largest lane-dense (multiple-of-128) tile <= length whose (channels, tile)
    block stays under max_block_bytes.  For length < 128 use the full extent
    (block dim == array dim is always layout-legal)."""
    if length < 128:
        return length
    lanes_cap = max(128, ((max_block_bytes // (channels * itemsize)) // 128) * 128)
    l_floor = (length // 128) * 128
    return min(lanes_cap, l_floor)


def batch_norm_2d(x_nchw, gamma, beta, *, eps=EPS,
                  fused_bytes_threshold=_FUSED_MAX_F32_BYTES):
    """Training-mode BatchNorm2d forward.

    x_nchw: (N, C, H, W); gamma, beta: (C,).  Returns (N, C, H, W).
    """
    N, C, H, W = x_nchw.shape
    L = H * W
    x_ncl = x_nchw.reshape(N, C, L)              # free, contiguous view of NCHW

    gamma_c1 = gamma.reshape(C, 1).astype(jnp.float32)
    beta_c1 = beta.reshape(C, 1).astype(jnp.float32)

    # ---- Fast path: whole activation resident in VMEM, single HBM read of x.
    if N * C * L * 4 <= fused_bytes_threshold:
        y_ncl = pl.pallas_call(
            functools.partial(_bn_fused_kernel, eps=eps),
            out_shape=jax.ShapeDtypeStruct((N, C, L), x_nchw.dtype),
            compiler_params=pltpu.CompilerParams(
                vmem_limit_bytes=_VMEM_LIMIT_BYTES),
        )(x_ncl, gamma_c1, beta_c1)
        return y_ncl.reshape(N, C, H, W)

    # ---- Two-pass streaming path.
    l_tile = _pick_l_tile(L, C, x_nchw.dtype.itemsize)
    grid = (N, pl.cdiv(L, l_tile))

    x_spec = pl.BlockSpec((pl.Squeezed(), C, l_tile), lambda n, l: (n, 0, l))
    acc_spec = pl.BlockSpec((pl.Squeezed(), C, 1), lambda n, l: (n, 0, 0))
    cvec_spec = pl.BlockSpec((C, 1), lambda n, l: (0, 0))

    # Pass 1: per-(n, channel) partial sum / sum-of-squares.  Batch axis is
    # "parallel" (each n owns its own accumulator block -> race-free megacore
    # sharding on v7x); the L axis revisits the accumulator -> "arbitrary".
    partial_sums, partial_sumsqs = pl.pallas_call(
        functools.partial(_bn_stats_kernel, l_total=L),
        out_shape=(jax.ShapeDtypeStruct((N, C, 1), jnp.float32),
                   jax.ShapeDtypeStruct((N, C, 1), jnp.float32)),
        grid_spec=pltpu.PrefetchScalarGridSpec(
            num_scalar_prefetch=0,
            grid=grid,
            in_specs=[x_spec],
            out_specs=(acc_spec, acc_spec),
        ),
        compiler_params=pltpu.CompilerParams(
            dimension_semantics=("parallel", "arbitrary"),
            vmem_limit_bytes=_VMEM_LIMIT_BYTES),
    )(x_ncl)

    # Fold batch statistics + affine params into per-channel scale/bias (tiny).
    count = jnp.float32(N * L)
    sums = jnp.sum(partial_sums, axis=0)                           # (C, 1)
    sumsqs = jnp.sum(partial_sumsqs, axis=0)                       # (C, 1)
    mean = sums / count
    var = jnp.maximum(sumsqs / count - mean * mean, 0.0)           # biased var
    scale = gamma_c1 * jax.lax.rsqrt(var + eps)
    bias = beta_c1 - mean * scale

    # Pass 2: streamed normalize, y = x * scale + bias.  Both grid axes are
    # independent -> fully "parallel".  Partial last L block is handled by
    # Pallas' masked writeback.
    y_ncl = pl.pallas_call(
        _bn_norm_kernel,
        out_shape=jax.ShapeDtypeStruct((N, C, L), x_nchw.dtype),
        grid_spec=pltpu.PrefetchScalarGridSpec(
            num_scalar_prefetch=0,
            grid=grid,
            in_specs=[x_spec, cvec_spec, cvec_spec],
            out_specs=x_spec,
        ),
        compiler_params=pltpu.CompilerParams(
            dimension_semantics=("parallel", "parallel"),
            vmem_limit_bytes=_VMEM_LIMIT_BYTES),
    )(x_ncl, scale, bias)

    return y_ncl.reshape(N, C, H, W)


if __name__ == "__main__":
    key = jax.random.PRNGKey(0)
    kx, kg, kb, kx2 = jax.random.split(key, 4)

    def _ref(x, gamma, beta):
        c = x.shape[1]
        mean = jnp.mean(x, axis=(0, 2, 3), keepdims=True)
        var = jnp.mean((x - mean) ** 2, axis=(0, 2, 3), keepdims=True)
        return (x - mean) / jnp.sqrt(var + EPS) * gamma.reshape(1, c, 1, 1) \
            + beta.reshape(1, c, 1, 1)

    # --- Case 1: small activation -> fused single-pass path.
    N, C, H, W = 2, 4, 16, 16
    x = jax.random.normal(kx, (N, C, H, W), dtype=jnp.float32)
    gamma = jax.random.normal(kg, (C,), dtype=jnp.float32) * 0.1 + 1.0
    beta = jax.random.normal(kb, (C,), dtype=jnp.float32) * 0.1

    out = jax.block_until_ready(batch_norm_2d(x, gamma, beta))
    assert out.shape == (N, C, H, W)
    assert jnp.allclose(out, _ref(x, gamma, beta), atol=3e-5, rtol=3e-5)

    # --- Case 2: force the tiled two-pass path with non-128-divisible H*W
    # (L = 144 -> one 128-lane tile + a masked 16-lane tail per n).
    N2, C2, H2, W2 = 2, 8, 12, 12
    x2 = jax.random.normal(kx2, (N2, C2, H2, W2), dtype=jnp.float32)
    gamma2 = jnp.linspace(0.8, 1.2, C2, dtype=jnp.float32)
    beta2 = jnp.linspace(-0.1, 0.1, C2, dtype=jnp.float32)

    out2 = jax.block_until_ready(
        batch_norm_2d(x2, gamma2, beta2, fused_bytes_threshold=0))
    assert out2.shape == (N2, C2, H2, W2)
    assert jnp.allclose(out2, _ref(x2, gamma2, beta2), atol=3e-5, rtol=3e-5)

    print("KERNEL_OK")
</pallas_src>

<mosaic_0001>
module attributes {stable_mosaic.version = 11 : i64} {
  func.func @_bn_fused_kernel(%arg0: memref<2x4x256xf32, #tpu.memory_space<vmem>>, %arg1: memref<4x1xf32, #tpu.memory_space<vmem>>, %arg2: memref<4x1xf32, #tpu.memory_space<vmem>>, %arg3: memref<2x4x256xf32, #tpu.memory_space<vmem>>) attributes {dimension_semantics = [], scalar_prefetch = 0 : i64, scratch_operands = 0 : i64, tpu.core_type = #tpu.core_type<tc>} {
    %c0 = arith.constant 0 : index
    %c0_0 = arith.constant 0 : index
    %c0_1 = arith.constant 0 : index
    %0 = vector.load %arg0[%c0, %c0_0, %c0_1] : memref<2x4x256xf32, #tpu.memory_space<vmem>>, vector<2x4x256xf32>
    %cst = arith.constant dense<0.000000e+00> : vector<2x4xf32>
    %1 = vector.multi_reduction <add>, %0, %cst [2] : vector<2x4x256xf32> to vector<2x4xf32>
    %2 = vector.shape_cast %1 : vector<2x4xf32> to vector<2x4x1xf32>
    %cst_2 = arith.constant dense<0.000000e+00> : vector<4x1xf32>
    %3 = vector.multi_reduction <add>, %2, %cst_2 [0] : vector<2x4x1xf32> to vector<4x1xf32>
    %4 = arith.mulf %0, %0 : vector<2x4x256xf32>
    %cst_3 = arith.constant dense<0.000000e+00> : vector<2x4xf32>
    %5 = vector.multi_reduction <add>, %4, %cst_3 [2] : vector<2x4x256xf32> to vector<2x4xf32>
    %6 = vector.shape_cast %5 : vector<2x4xf32> to vector<2x4x1xf32>
    %cst_4 = arith.constant dense<0.000000e+00> : vector<4x1xf32>
    %7 = vector.multi_reduction <add>, %6, %cst_4 [0] : vector<2x4x1xf32> to vector<4x1xf32>
    %cst_5 = arith.constant 5.120000e+02 : f32
    %8 = vector.broadcast %cst_5 : f32 to vector<4x1xf32>
    %9 = arith.divf %3, %8 : vector<4x1xf32>
    %cst_6 = arith.constant 5.120000e+02 : f32
    %10 = vector.broadcast %cst_6 : f32 to vector<4x1xf32>
    %11 = arith.divf %7, %10 : vector<4x1xf32>
    %12 = arith.mulf %9, %9 : vector<4x1xf32>
    %13 = arith.subf %11, %12 : vector<4x1xf32>
    %cst_7 = arith.constant 0.000000e+00 : f32
    %14 = vector.broadcast %cst_7 : f32 to vector<4x1xf32>
    %15 = arith.maximumf %13, %14 : vector<4x1xf32>
    %c0_8 = arith.constant 0 : index
    %c0_9 = arith.constant 0 : index
    %16 = vector.load %arg1[%c0_8, %c0_9] : memref<4x1xf32, #tpu.memory_space<vmem>>, vector<4x1xf32>
    %cst_10 = arith.constant 1.000000e-03 : f32
    %17 = vector.broadcast %cst_10 : f32 to vector<4x1xf32>
    %18 = arith.addf %15, %17 : vector<4x1xf32>
    %19 = math.rsqrt %18 : vector<4x1xf32>
    %20 = arith.mulf %16, %19 : vector<4x1xf32>
    %c0_11 = arith.constant 0 : index
    %c0_12 = arith.constant 0 : index
    %21 = vector.load %arg2[%c0_11, %c0_12] : memref<4x1xf32, #tpu.memory_space<vmem>>, vector<4x1xf32>
    %22 = arith.mulf %9, %20 : vector<4x1xf32>
    %23 = arith.subf %21, %22 : vector<4x1xf32>
    %24 = vector.shape_cast %20 : vector<4x1xf32> to vector<1x4x1xf32>
    %25 = vector.broadcast %24 : vector<1x4x1xf32> to vector<2x4x256xf32>
    %26 = arith.mulf %0, %25 : vector<2x4x256xf32>
    %27 = vector.shape_cast %23 : vector<4x1xf32> to vector<1x4x1xf32>
    %28 = vector.broadcast %27 : vector<1x4x1xf32> to vector<2x4x256xf32>
    %29 = arith.addf %26, %28 : vector<2x4x256xf32>
    %c0_13 = arith.constant 0 : index
    %c0_14 = arith.constant 0 : index
    %c0_15 = arith.constant 0 : index
    %30 = vector.load %arg3[%c0_13, %c0_14, %c0_15] : memref<2x4x256xf32, #tpu.memory_space<vmem>>, vector<2x4x256xf32>
    tpu.vector_store %arg3[%c0_13, %c0_14, %c0_15], %29 {strides = array<i32>} : memref<2x4x256xf32, #tpu.memory_space<vmem>>, vector<2x4x256xf32>,
    return
  }
}

</mosaic_0001>

<llo_original>
// kernel: tpu_custom_call.1
$region0: #{tpu_custom_call.1}
  #allocation0 [shape = 'u32[]', space=smem, size = 0x4, offset = 0x4, fixed_abs, tag = 'smem constant byte address 0x4 - core index']
  #allocation1 [shape = 'u32[72,128]{1,0:T(1,128)}', space=vmem, size = 0x9000, scoped, tag = 'internal scratch']
  %s0 = inlined_call_operand.hbm [shape: f32[2,4,256], index: 0, kind: input, shape index: {}]
  %s1 = inlined_call_operand.vmem [shape: f32[4,1], index: 1, kind: input, shape index: {}]
  %s2 = inlined_call_operand.vmem [shape: f32[4,1], index: 2, kind: input, shape index: {}]
  %s3 = inlined_call_operand.hbm [shape: f32[2,4,256], index: 3, kind: output, shape index: {}]
  %s4 = sld [smem:[#allocation0]]
  $region26: #{tpu_custom_call.1} parent=0
    _
  %s6 = ssub.s32 1, %s4
  %s7 = scalar_select 0, %s6, %s4
  $region1: #{tpu_custom_call.1} parent=0
    #allocation2 [shape = 'u8[8192]{0}', space=vmem, size = 0x2000, scoped, tag = 'input window, operand 0, single buffered']
    #allocation3 [shape = 's32[1]{0}', space=sflag, size = 0x4, scoped, tag = 'scoped memory for tpu_custom_call.1']
    #allocation4 [shape = 's32[1]{0}', space=sflag, size = 0x4, scoped, tag = 'scoped memory for tpu_custom_call.1']
    #allocation5 [shape = 'u8[8192]{0}', space=vmem, size = 0x2000, scoped, tag = 'output window, operand 0, single buffered']
    %8 = vsyncpa [#allocation3], 0
    %9 = vsyncpa [#allocation4], 0
    // Predicated region
    $region2: #{tpu_custom_call.1} parent=1 // pred_check
      _
    $region3: #{tpu_custom_call.1} parent=1 // pred_check_branch
      %11 = sbr.rel (0) target = $region5
    $region4: #{tpu_custom_call.1} parent=1 // pred_region
      %13 = vsyncadd [#allocation3], 0
      %s14 = sshll.u32 %s0, 4
      %s15 = int_to_ptr.hbm [resolvable:$true] %s14
      %s16 = sshll.u32 [#allocation2], 4
      %s17 = int_to_ptr.vmem [resolvable:$true] %s16
      %22 = dma.hbm_to_vmem [thread:$0]  %s15, 256, %s17, [#allocation3], 128, 128, 8
    $region5: #{tpu_custom_call.1} parent=1 // pred_fallthru
      _
    // Predicated region
    $region6: #{tpu_custom_call.1} parent=1 // pred_check
      _
    $region7: #{tpu_custom_call.1} parent=1 // pred_check_branch
      %24 = sbr.rel (0) target = $region9
    $region8: #{tpu_custom_call.1} parent=1 // pred_region
      _
    $region9: #{tpu_custom_call.1} parent=1 // pred_fallthru
      _
    // Predicated region
    $region10: #{tpu_custom_call.1} parent=1 // pred_check
      _
    $region11: #{tpu_custom_call.1} parent=1 // pred_check_branch
      %26 = sbr.rel (0) target = $region13
    $region12: #{tpu_custom_call.1} parent=1 // pred_region
      _
    $region13: #{tpu_custom_call.1} parent=1 // pred_fallthru
      _
    // Predicated region
    $region14: #{tpu_custom_call.1} parent=1 // pred_check
      _
    $region15: #{tpu_custom_call.1} parent=1 // pred_check_branch
      %28 = sbr.rel (0) target = $region17
    $region16: #{tpu_custom_call.1} parent=1 // pred_region
      %30 = dma.done [#allocation3], 256
    $region17: #{tpu_custom_call.1} parent=1 // pred_fallthru
      _
    %v31 = vld [vmem:[#allocation2] sm:$0xff]
    %v32 = vld [vmem:[#allocation2 + $0x8] sm:$0xff]
    %35 = vst [vmem:[#allocation1] ss:$2 sm:$0xff] %v31
    %v36 = vld.sshfl [vmem:[#allocation1] sm:$0xff pattern:$0x75316420]
    %v37 = vld.sshfl [vmem:[#allocation1 + $0x8] sm:$0xff pattern:$0x75316420]
    %s38 = scalar_lea.vmem [#allocation1], 16
    %39 = vst [vmem:[%s38] ss:$2 sm:$0xff] %v32
    %v40 = vld.sshfl [vmem:[#allocation1 + $0x10] sm:$0xff pattern:$0x75316420]
    %v41 = vld.sshfl [vmem:[#allocation1 + $0x18] sm:$0xff pattern:$0x75316420]
    %vm46 = vcmask 1043456
    %v47 = vsel %vm46, %v36, 0.0
    %v48 = vsel %vm46, %v37, 0.0
    %v49 = vadd.f32 %v47, %v48
    %50 = vadd.xlane.f32.xlu0 %v49
    %v51 = vpop.xlane.xlu0 %50
    %v52 = vsel %vm46, %v40, 0.0
    %v53 = vsel %vm46, %v41, 0.0
    %v54 = vadd.f32 %v52, %v53
    %55 = vadd.xlane.f32.xlu0 %v54
    %v56 = vpop.xlane.xlu0 %55
    %v57 = vsel %vm46, %v51, 0.0
    %v58 = vsel %vm46, %v56, 0.0
    %v59 = vadd.f32 %v57, %v58
    %v60 = vmul.f32 %v31, %v31
    %v61 = vmul.f32 %v32, %v32
    %64 = vst [vmem:[#allocation1] ss:$2 sm:$0xff] %v60
    %v65 = vld.sshfl [vmem:[#allocation1] sm:$0xff pattern:$0x75316420]
    %v66 = vld.sshfl [vmem:[#allocation1 + $0x8] sm:$0xff pattern:$0x75316420]
    %s67 = scalar_lea.vmem [#allocation1], 16
    %68 = vst [vmem:[%s67] ss:$2 sm:$0xff] %v61
    %v69 = vld.sshfl [vmem:[#allocation1 + $0x10] sm:$0xff pattern:$0x75316420]
    %v70 = vld.sshfl [vmem:[#allocation1 + $0x18] sm:$0xff pattern:$0x75316420]
    %v75 = vsel %vm46, %v65, 0.0
    %v76 = vsel %vm46, %v66, 0.0
    %v77 = vadd.f32 %v75, %v76
    %78 = vadd.xlane.f32.xlu0 %v77
    %v79 = vpop.xlane.xlu0 %78
    %v80 = vsel %vm46, %v69, 0.0
    %v81 = vsel %vm46, %v70, 0.0
    %v82 = vadd.f32 %v80, %v81
    %83 = vadd.xlane.f32.xlu0 %v82
    %v84 = vpop.xlane.xlu0 %83
    %v85 = vsel %vm46, %v79, 0.0
    %v86 = vsel %vm46, %v84, 0.0
    %v87 = vadd.f32 %v85, %v86
    %v88 = vrcp.pop 512.0
    %v89 = vmul.f32 512.0, %v88
    %v90 = vsub.f32 1.0, %v89
    %v91 = vmul.f32 %v88, %v90
    %v92 = vadd.f32 %v88, %v91
    %vm93 = vweird.f32 %v88
    %v94 = vsel %vm93, %v88, %v92
    %v95 = vmul.f32 %v59, %v94
    %v96 = vmul.f32 %v87, %v94
    %v97 = vmul.f32 %v95, %v95
    %v98 = vsub.f32 %v96, %v97
    %v99 = vmax.f32 %v98, 0.0
    %v100 = vld [vmem:[%s1] sm:$0xf]
    %v101 = vadd.f32 %v99, 0.001
    %v102 = vrsqrt.pop %v101
    %v103 = vmul.f32 %v102, %v101
    %v104 = vmul.f32 %v103, %v102
    %v105 = vmul.f32 0.5, %v104
    %v106 = vsub.f32 1.5, %v105
    %v107 = vmul.f32 %v102, %v106
    %vm108 = vweird.f32 %v101
    %vm109 = vweird.f32 %v102
    %vm110 = vmor %vm108, %vm109
    %v111 = vsel %vm110, %v102, %v107
    %v112 = vmul.f32 %v100, %v111
    %v113 = vld [vmem:[%s2] sm:$0xf]
    %v114 = vmul.f32 %v95, %v112
    %v115 = vsub.f32 %v113, %v114
    %117 = vset.pattern.permute.xlu0 0
    %118 = vperm.xlu0 %117, %v112
    %v119 = vpop.permute.xlu0 %118
    %v121 = vunpack.c.l.s4 839922192
    %v122 = vunpack.c.0.s8 %v121
    %v123 = vperm.slane %v119, %v122
    %v125 = vmul.f32 %v31, %v123
    %v126 = vmul.f32 %v32, %v123
    %128 = vset.pattern.permute.xlu0 0
    %129 = vperm.xlu0 %128, %v115
    %v130 = vpop.permute.xlu0 %129
    %v132 = vunpack.c.l.s4 839922192
    %v133 = vunpack.c.0.s8 %v132
    %v134 = vperm.slane %v130, %v133
    %v136 = vadd.f32 %v125, %v134
    %v137 = vadd.f32 %v126, %v134
    %138 = vst [vmem:[#allocation5] sm:$0xff] %v136
    %139 = vst [vmem:[#allocation5 + $0x8] sm:$0xff] %v137
    // Predicated region
    $region18: #{tpu_custom_call.1} parent=1 // pred_check
      _
    $region19: #{tpu_custom_call.1} parent=1 // pred_check_branch
      %141 = sbr.rel (0) target = $region21
    $region20: #{tpu_custom_call.1} parent=1 // pred_region
      %143 = vsyncadd [#allocation4], 0
      %s144 = sshll.u32 [#allocation5], 4
      %s145 = int_to_ptr.vmem [resolvable:$true] %s144
      %s146 = sshll.u32 %s3, 4
      %s147 = int_to_ptr.hbm [resolvable:$true] %s146
      %152 = dma.vmem_to_hbm [thread:$0]  %s145, 256, %s147, [#allocation4], 128, 128, 8
    $region21: #{tpu_custom_call.1} parent=1 // pred_fallthru
      _
    // Predicated region
    $region22: #{tpu_custom_call.1} parent=1 // pred_check
      _
    $region23: #{tpu_custom_call.1} parent=1 // pred_check_branch
      %154 = sbr.rel (0) target = $region25
    $region24: #{tpu_custom_call.1} parent=1 // pred_region
      %156 = dma.done [#allocation4], 256
    $region25: #{tpu_custom_call.1} parent=1 // pred_fallthru
      _
    %157 = vsyncpa [#allocation3], 1
    %158 = vsyncpa [#allocation4], 1

</llo_original>
